<compile_context>
chip_gen: v5e
topology: v5e:2x2
jax: 0.10.0
libtpu: 0.0.40
codegen_flags: <defaults>
</compile_context>

<pallas_src>
import functools

import jax
import jax.numpy as jnp
from jax.experimental import pallas as pl
from jax.experimental.pallas import tpu as pltpu

LN_EPS = 1e-5
_SINGLE_BUFFER_MIN_BYTES = 1 << 20   # single-buffer constant operands >= 1 MiB


def _cdiv(a, b):
    return -(-a // b)


def _round_up(a, b):
    return _cdiv(a, b) * b


@functools.lru_cache(maxsize=None)
def _vmem_caps():
    """(vmem_limit_bytes, planning_budget) for the local TPU generation."""
    phys = 64 * 1024 * 1024             # conservative default: v7x (64 MiB / TC)
    try:                                # v5e / v6e report 128 MiB
        cap = int(getattr(pltpu.get_tpu_info(), "vmem_capacity_bytes", 0) or 0)
        if cap > 0:
            phys = cap
    except Exception:
        pass
    limit = (phys * 3) // 4             # scoped-VMEM limit handed to Mosaic
    budget = (phys * 3) // 5            # conservative planning budget
    return limit, budget


def _pick_tile(n_rows, d_in, n_out, x_bytes, w_bytes, grid_cols=1):
    """Largest row tile whose estimated VMEM footprint fits the budget."""
    _, budget = _vmem_caps()
    min_tm = 16 if x_bytes < 4 else 8          # (16,128) packing for sub-32-bit
    w_cost = d_in * n_out * w_bytes + 4 * n_out   # W (single-buffered) + f32 bias
    tm = min_tm
    for cand in (1024, 512, 256, 128, 64, 32, 16, 8):
        if cand < min_tm:
            break
        cost = (2 * cand * d_in * x_bytes      # double-buffered input tiles
                + 2 * cand * n_out * x_bytes   # double-buffered output tiles
                + 2 * cand * d_in * 4          # f32 x / centered-x temporaries
                + cand * d_in * w_bytes        # MXU-dtype copy of normalized rows
                + cand * n_out * 4             # f32 matmul accumulator
                + w_cost)
        if cost <= budget:
            tm = cand
            break
    # Keep enough grid steps for DMA pipelining and for both v7x TensorCores
    # (grid axes are marked "parallel"); harmless on single-core chips.
    while tm > 256 and _cdiv(n_rows, tm) * grid_cols < 8:
        tm //= 2
    while tm > min_tm and _cdiv(n_rows, tm) * grid_cols < 2:
        tm //= 2
    if n_rows <= tm:
        return n_rows                  # single full-extent block (always legal)
    return tm


def _const_spec(block_shape, index_map, nbytes):
    """BlockSpec for an operand whose block never changes across grid steps."""
    if nbytes >= _SINGLE_BUFFER_MIN_BYTES:
        # No second pipeline buffer needed: the block is revisited, not streamed.
        return pl.BlockSpec(block_shape, index_map, pipeline_mode=pl.Buffered(1))
    return pl.BlockSpec(block_shape, index_map)


def _segmerge_kernel(x_ref, w_ref, b_ref, o_ref):
    """LayerNorm (affine pre-folded into W/b) + Linear on one row tile.

    x_ref: (TM, d_in)   w_ref: (d_in, n_out)   b_ref: (1, n_out) f32
    o_ref: (TM, n_out)

    NOTE: rows past the logical end in the final (partial) block hold undefined
    data; everything here must stay row-local (LN stats reduce over the feature
    axis only) -- Pallas masks those rows' stores.
    """
    xf = x_ref[...].astype(jnp.float32)
    mean = jnp.mean(xf, axis=-1, keepdims=True)
    xc = xf - mean
    var = jnp.mean(xc * xc, axis=-1, keepdims=True)
    # Stats stay f32; gamma/beta are folded into W/b in the wrapper.
    y = xc * jax.lax.rsqrt(var + LN_EPS)
    out = jnp.dot(y.astype(w_ref.dtype), w_ref[...],
                  preferred_element_type=jnp.float32)
    o_ref[...] = (out + b_ref[...]).astype(o_ref.dtype)


def _compiler_params(semantics):
    return pltpu.CompilerParams(dimension_semantics=semantics,
                                vmem_limit_bytes=_vmem_caps()[0])


def _call_rows(x_rows, w_k, b2):
    """(M, d_in) rows -> (M, n_out); 1-D parallel grid over row tiles."""
    m, d_in = x_rows.shape
    n_out = w_k.shape[1]
    tm = _pick_tile(m, d_in, n_out, x_rows.dtype.itemsize, w_k.dtype.itemsize)
    return pl.pallas_call(
        _segmerge_kernel,
        out_shape=jax.ShapeDtypeStruct((m, n_out), x_rows.dtype),
        grid_spec=pltpu.PrefetchScalarGridSpec(
            num_scalar_prefetch=0,
            grid=(pl.cdiv(m, tm),),
            in_specs=[
                pl.BlockSpec((tm, d_in), lambda i: (i, 0)),
                _const_spec((d_in, n_out), lambda i: (0, 0),
                            d_in * n_out * w_k.dtype.itemsize),
                _const_spec((1, n_out), lambda i: (0, 0), 0),
            ],
            out_specs=pl.BlockSpec((tm, n_out), lambda i: (i, 0)),
        ),
        compiler_params=_compiler_params(("parallel",)),
    )(x_rows, w_k, b2)


def _call_windows(x_wide, d_in, full_windows, w_k, b2):
    """Zero-copy ragged path: x_wide is (R, seg_num*d_model); column block j
    of width d_in (= win_size*d_model, a multiple of 128) is window j."""
    r = x_wide.shape[0]
    n_out = w_k.shape[1]
    tr = _pick_tile(r, d_in, n_out, x_wide.dtype.itemsize, w_k.dtype.itemsize,
                    grid_cols=full_windows)
    return pl.pallas_call(
        _segmerge_kernel,
        out_shape=jax.ShapeDtypeStruct((r, full_windows * n_out), x_wide.dtype),
        grid_spec=pltpu.PrefetchScalarGridSpec(
            num_scalar_prefetch=0,
            grid=(pl.cdiv(r, tr), full_windows),
            in_specs=[
                pl.BlockSpec((tr, d_in), lambda i, j: (i, j)),
                _const_spec((d_in, n_out), lambda i, j: (0, 0),
                            d_in * n_out * w_k.dtype.itemsize),
                _const_spec((1, n_out), lambda i, j: (0, 0), 0),
            ],
            out_specs=pl.BlockSpec((tr, n_out), lambda i, j: (i, j)),
        ),
        compiler_params=_compiler_params(("parallel", "parallel")),
    )(x_wide, w_k, b2)


def _prep_params(gamma, beta, w, b, d_in, n_out, w_dtype):
    """Fold the LayerNorm affine into the Linear (exact, in f32), pad to n_out."""
    gamma_f = gamma.reshape(d_in).astype(jnp.float32)
    beta_f = beta.reshape(d_in).astype(jnp.float32)
    w_f = w.astype(jnp.float32)
    w_fold = w_f * gamma_f[:, None]
    b_fold = b.astype(jnp.float32) + jnp.matmul(
        beta_f, w_f, precision=jax.lax.Precision.HIGHEST)
    d_model = w.shape[1]
    if n_out != d_model:
        w_fold = jnp.pad(w_fold, ((0, 0), (0, n_out - d_model)))
        b_fold = jnp.pad(b_fold, (0, n_out - d_model))
    return w_fold.astype(w_dtype), b_fold.reshape(1, n_out)


@functools.partial(jax.jit, static_argnames=("win_size", "mxu_dtype"))
def seg_merging(x, gamma, beta, w, b, *, win_size, mxu_dtype=None):
    """x: (B, ts_d, seg_num, d_model) -> (B, ts_d, ceil(seg_num/win_size), d_model).

    mxu_dtype: optional override for the matmul operand dtype (e.g.
    jnp.bfloat16 on v5e when the model is f32 -- small numerics change).
    """
    B, ts_d, seg_num, d_model = x.shape
    d_in = win_size * d_model
    R = B * ts_d
    full_windows = seg_num // win_size
    rem = seg_num % win_size
    w_dtype = mxu_dtype if mxu_dtype is not None else w.dtype

    if rem == 0:
        # Aligned: grouping win_size adjacent segments is a zero-copy reshape.
        n_out = 128 if d_model < 128 else d_model     # lane-pad only when tiny
        w_k, b2 = _prep_params(gamma, beta, w, b, d_in, n_out, w_dtype)
        out = _call_rows(x.reshape(R * full_windows, d_in), w_k, b2)
        out = out.reshape(B, ts_d, full_windows, n_out)
    elif d_in % 128 == 0 and full_windows >= 1:
        # Ragged, lane-aligned window width: no HBM rewrite of x.  Full windows
        # are read straight out of x via a 2-D (row, window) grid; the single
        # partial tail window (R rows, repeats the trailing segments) is a tiny
        # gather fed to the same kernel.
        n_out = _round_up(max(d_model, 128), 128)     # column block must be 128-aligned
        w_k, b2 = _prep_params(gamma, beta, w, b, d_in, n_out, w_dtype)
        x_wide = x.reshape(R, seg_num * d_model)      # zero-copy
        out_main = _call_windows(x_wide, d_in, full_windows, w_k, b2)
        out_main = out_main.reshape(B, ts_d, full_windows, n_out)
        pad_num = win_size - rem
        tail = jnp.concatenate(                       # tiny: R * d_in elements
            [x[:, :, seg_num - rem:, :], x[:, :, seg_num - pad_num:, :]], axis=2)
        out_tail = _call_rows(tail.reshape(R, d_in), w_k, b2)
        out = jnp.concatenate(
            [out_main, out_tail.reshape(B, ts_d, 1, n_out)], axis=2)
    else:
        # TODO(synk): ragged case with win_size*d_model not a multiple of 128 --
        # fall back to the torch-style segment padding (one extra HBM pass on x).
        pad_num = win_size - rem
        x = jnp.concatenate([x, x[:, :, -pad_num:, :]], axis=2)
        new_seg = x.shape[2] // win_size
        n_out = 128 if d_model < 128 else d_model
        w_k, b2 = _prep_params(gamma, beta, w, b, d_in, n_out, w_dtype)
        out = _call_rows(x.reshape(R * new_seg, d_in), w_k, b2)
        out = out.reshape(B, ts_d, new_seg, n_out)

    if n_out != d_model:
        out = out[..., :d_model]
    return out


def _reference(x, gamma, beta, w, b, win_size):
    """Pure-JAX reference mirroring the PyTorch forward (f32)."""
    seg_num = x.shape[2]
    pad_num = seg_num % win_size
    if pad_num != 0:
        pad_num = win_size - pad_num
        x = jnp.concatenate([x, x[:, :, -pad_num:, :]], axis=-2)
    segs = [x[:, :, i::win_size, :] for i in range(win_size)]
    xf = jnp.concatenate(segs, axis=-1).astype(jnp.float32)
    mean = jnp.mean(xf, axis=-1, keepdims=True)
    var = jnp.mean((xf - mean) ** 2, axis=-1, keepdims=True)
    y = (xf - mean) * jax.lax.rsqrt(var + LN_EPS)
    y = y * gamma.astype(jnp.float32) + beta.astype(jnp.float32)
    return jnp.matmul(y, w.astype(jnp.float32),
                      precision=jax.lax.Precision.HIGHEST) + b.astype(jnp.float32)


if __name__ == "__main__":
    def run_case(B, ts_d, seg_num, d_model, win_size, dtype, tol):
        d_in = win_size * d_model
        key = jax.random.PRNGKey(0)
        kx, kg, kb, kw, kbi = jax.random.split(key, 5)
        x = jax.random.normal(kx, (B, ts_d, seg_num, d_model),
                              dtype=jnp.float32).astype(dtype)
        gamma = 1.0 + 0.02 * jax.random.normal(kg, (d_in,), dtype=jnp.float32)
        beta = 0.02 * jax.random.normal(kb, (d_in,), dtype=jnp.float32)
        w = (jax.random.normal(kw, (d_in, d_model), dtype=jnp.float32)
             / jnp.sqrt(float(d_in))).astype(dtype)
        b = 0.01 * jax.random.normal(kbi, (d_model,), dtype=jnp.float32)

        out = jax.block_until_ready(
            seg_merging(x, gamma, beta, w, b, win_size=win_size))
        ref = _reference(x, gamma, beta, w, b, win_size)
        assert out.shape == ref.shape, (out.shape, ref.shape)
        err = float(jnp.max(jnp.abs(out.astype(jnp.float32) - ref)))
        assert err < tol, (
            f"shape={(B, ts_d, seg_num, d_model)} win={win_size} "
            f"dtype={dtype} err={err}")

    # aligned zero-copy path, ragged fallback (d_in % 128 != 0),
    # ragged zero-copy window path, and bf16 on the window path.
    run_case(2, 4, 8, 32, 2, jnp.float32, 2e-3)
    run_case(2, 4, 7, 32, 2, jnp.float32, 2e-3)
    run_case(2, 4, 7, 64, 2, jnp.float32, 2e-3)
    run_case(2, 4, 6, 32, 4, jnp.bfloat16, 1e-1)
    print("KERNEL_OK")
</pallas_src>

<mosaic_0001>
module attributes {stable_mosaic.version = 11 : i64} {
  func.func @_segmerge_kernel(%arg0: i32, %arg1: memref<16x64xf32, #tpu.memory_space<vmem>>, %arg2: memref<64x128xf32, #tpu.memory_space<vmem>>, %arg3: memref<1x128xf32, #tpu.memory_space<vmem>>, %arg4: memref<16x128xf32, #tpu.memory_space<vmem>>) attributes {dimension_semantics = [#tpu.dimension_semantics<parallel>], iteration_bounds = array<i64: 2>, scalar_prefetch = 0 : i64, scratch_operands = 0 : i64, tpu.core_type = #tpu.core_type<tc>, window_params = [{transform_indices = @transform_0, window_bounds = array<i64: 16, 64>}, {pipeline_mode = #tpu.pipeline_mode<synchronous>, transform_indices = @transform_1, window_bounds = array<i64: 64, 128>}, {pipeline_mode = #tpu.pipeline_mode<synchronous>, transform_indices = @transform_2, window_bounds = array<i64: 1, 128>}, {transform_indices = @transform_3, window_bounds = array<i64: 16, 128>}]} {
    %c0 = arith.constant 0 : index
    %c0_0 = arith.constant 0 : index
    %0 = vector.load %arg1[%c0, %c0_0] : memref<16x64xf32, #tpu.memory_space<vmem>>, vector<16x64xf32>
    %cst = arith.constant dense<0.000000e+00> : vector<16xf32>
    %1 = vector.multi_reduction <add>, %0, %cst [1] : vector<16x64xf32> to vector<16xf32>
    %2 = vector.shape_cast %1 : vector<16xf32> to vector<16x1xf32>
    %cst_1 = arith.constant 6.400000e+01 : f32
    %3 = vector.broadcast %cst_1 : f32 to vector<16x1xf32>
    %4 = arith.divf %2, %3 : vector<16x1xf32>
    %5 = vector.broadcast %4 : vector<16x1xf32> to vector<16x64xf32>
    %6 = arith.subf %0, %5 : vector<16x64xf32>
    %7 = arith.mulf %6, %6 : vector<16x64xf32>
    %cst_2 = arith.constant dense<0.000000e+00> : vector<16xf32>
    %8 = vector.multi_reduction <add>, %7, %cst_2 [1] : vector<16x64xf32> to vector<16xf32>
    %9 = vector.shape_cast %8 : vector<16xf32> to vector<16x1xf32>
    %cst_3 = arith.constant 6.400000e+01 : f32
    %10 = vector.broadcast %cst_3 : f32 to vector<16x1xf32>
    %11 = arith.divf %9, %10 : vector<16x1xf32>
    %cst_4 = arith.constant 9.99999974E-6 : f32
    %12 = vector.broadcast %cst_4 : f32 to vector<16x1xf32>
    %13 = arith.addf %11, %12 : vector<16x1xf32>
    %14 = math.rsqrt %13 : vector<16x1xf32>
    %15 = vector.broadcast %14 : vector<16x1xf32> to vector<16x64xf32>
    %16 = arith.mulf %6, %15 : vector<16x64xf32>
    %c0_5 = arith.constant 0 : index
    %c0_6 = arith.constant 0 : index
    %17 = vector.load %arg2[%c0_5, %c0_6] : memref<64x128xf32, #tpu.memory_space<vmem>>, vector<64x128xf32>
    %cst_7 = arith.constant dense<0.000000e+00> : vector<16x128xf32>
    %18 = tpu.matmul %16, %17, %cst_7 {dimension_numbers = #tpu.dot_dimension_numbers<[1], [0], [0], [1], [0, 0, 1, 1], [], []>} : vector<16x64xf32>, vector<64x128xf32>, vector<16x128xf32> -> vector<16x128xf32>
    %c0_8 = arith.constant 0 : index
    %c0_9 = arith.constant 0 : index
    %19 = vector.load %arg3[%c0_8, %c0_9] : memref<1x128xf32, #tpu.memory_space<vmem>>, vector<1x128xf32>
    %20 = vector.broadcast %19 : vector<1x128xf32> to vector<16x128xf32>
    %21 = arith.addf %18, %20 : vector<16x128xf32>
    %c0_10 = arith.constant 0 : index
    %c0_11 = arith.constant 0 : index
    %22 = vector.load %arg4[%c0_10, %c0_11] : memref<16x128xf32, #tpu.memory_space<vmem>>, vector<16x128xf32>
    tpu.vector_store %arg4[%c0_10, %c0_11], %21 {strides = array<i32>} : memref<16x128xf32, #tpu.memory_space<vmem>>, vector<16x128xf32>,
    return
  }
  func.func @transform_0(%arg0: i32) -> (i32, i32) {
    %c0_i32 = arith.constant 0 : i32
    %c0_i32_0 = arith.constant 0 : i32
    return %arg0, %c0_i32 : i32, i32
  }
  func.func @transform_1(%arg0: i32) -> (i32, i32) {
    %c0_i32 = arith.constant 0 : i32
    %c0_i32_0 = arith.constant 0 : i32
    %c0_i32_1 = arith.constant 0 : i32
    return %c0_i32, %c0_i32_0 : i32, i32
  }
  func.func @transform_2(%arg0: i32) -> (i32, i32) {
    %c0_i32 = arith.constant 0 : i32
    %c0_i32_0 = arith.constant 0 : i32
    %c0_i32_1 = arith.constant 0 : i32
    return %c0_i32, %c0_i32_0 : i32, i32
  }
  func.func @transform_3(%arg0: i32) -> (i32, i32) {
    %c0_i32 = arith.constant 0 : i32
    %c0_i32_0 = arith.constant 0 : i32
    return %arg0, %c0_i32 : i32, i32
  }
}

</mosaic_0001>

<llo_original>
// kernel: seg_merging.1
$region0: #{seg_merging.1}
  #allocation0 [shape = 'u32[]', space=smem, size = 0x4, offset = 0x4, fixed_abs, tag = 'smem constant byte address 0x4 - core index']
  #allocation1 [shape = 'u32[72,128]{1,0:T(1,128)}', space=vmem, size = 0x9000, scoped, tag = 'internal scratch']
  %s0 = inlined_call_operand.vmem [shape: f32[32,64], index: 0, kind: input, shape index: {}]
  %s1 = inlined_call_operand.vmem [shape: f32[64,128], index: 1, kind: input, shape index: {}]
  %s2 = inlined_call_operand.vmem [shape: f32[1,128], index: 2, kind: input, shape index: {}]
  %s3 = inlined_call_operand.hbm [shape: f32[32,128], index: 3, kind: output, shape index: {}]
  %s4 = sld [smem:[#allocation0]]
  $region45: #{seg_merging.1} parent=0
    _
  %s6 = ssub.s32 1, %s4
  %s7 = scalar_select 0, %s6, %s4
  $region1: #{seg_merging.1} parent=0
    #allocation2 [shape = 'u8[16384]{0}', space=vmem, size = 0x4000, scoped, tag = 'output window, operand 0']
    #allocation3 [shape = 's32[2]{0}', space=sflag, size = 0x8, scoped, tag = 'scoped memory for seg_merging.1']
    %8 = vsyncpa [#allocation3], 0
    %s9 = scalar_lea.sflag [#allocation3], 1
    %10 = vsyncpa %s9, 0
    loop: start=0, step=1, limit=4
    $region2: #{seg_merging.1} parent=1 // loop_pre_header
      _
    $region3: #{seg_merging.1} parent=1 // loop_header
      %s12 = sphi 0, %s16
      %p13 = scmp.ge.s32.totalorder %s12, 4
      %s22 = sphi 0, %s24
      %s25 = sphi 0, %s22
      %s26 = sphi 0, %s25
      %s42 = sphi 0, %s26
      %s46 = sphi 0, %s46
      %s48 = sphi 0, %s46
      %s49 = sphi 0, %s48
      %s63 = sphi 0, %s49
      %s67 = sphi 0, %s67
      %s69 = sphi 0, %s67
      %s70 = sphi 0, %s69
      %s84 = sphi 0, %s70
      %s90 = sphi 0, %s92
      %s93 = sphi 0, %s90
      %s94 = sphi 0, %s93
      %s110 = sphi 0, %s94
    $region4: #{seg_merging.1} parent=1 // loop_header_branch
      %15 = sbr.rel (%p13) target = $region8
    $region5: #{seg_merging.1} parent=1 // loop_body
      %s17 = ssub.s32 %s12, 1
      %s18 = ssub.s32 %s12, 2
      %s19 = sadd.s32 %s12, 1
      %s20 = ssub.s32 %s12, %s19
      %p21 = scmp.eq.s32.totalorder %s20, 0
      %s23 = sadd.s32 %s22, 1
      %s24 = scalar_select %p21, %s22, %s23
      %p27 = pneg %p21
      %p28 = scmp.eq.s32.totalorder %s12, 1
      %p29 = por %p27, %p28
      %p30 = scmp.ne.s32.totalorder %s22, %s25
      %p31 = scmp.eq.s32.totalorder %s12, 0
      %p32 = por %p30, %p31
      %p33 = scmp.ne.s32.totalorder %s22, %s25
      %p34 = scmp.eq.s32.totalorder %s17, 1
      %p35 = por %p33, %p34
      %p36 = scmp.ne.s32.totalorder %s25, %s26
      %p37 = scmp.eq.s32.totalorder %s17, 0
      %p38 = por %p36, %p37
      %p39 = scmp.ne.s32.totalorder %s25, %s26
      %p40 = scmp.eq.s32.totalorder %s18, 1
      %p41 = por %p39, %p40
      %p43 = scmp.ne.s32.totalorder %s26, %s42
      %p44 = scmp.eq.s32.totalorder %s18, 0
      %p45 = por %p43, %p44
      %s47 = sadd.s32 %s46, 1
      %p50 = scmp.eq.s32.totalorder %s12, 1
      %p51 = scmp.ne.s32.totalorder %s46, %s48
      %p52 = scmp.eq.s32.totalorder %s12, 0
      %p53 = por %p51, %p52
      %p54 = scmp.ne.s32.totalorder %s46, %s48
      %p55 = scmp.eq.s32.totalorder %s17, 1
      %p56 = por %p54, %p55
      %p57 = scmp.ne.s32.totalorder %s48, %s49
      %p58 = scmp.eq.s32.totalorder %s17, 0
      %p59 = por %p57, %p58
      %p60 = scmp.ne.s32.totalorder %s48, %s49
      %p61 = scmp.eq.s32.totalorder %s18, 1
      %p62 = por %p60, %p61
      %p64 = scmp.ne.s32.totalorder %s49, %s63
      %p65 = scmp.eq.s32.totalorder %s18, 0
      %p66 = por %p64, %p65
      %s68 = sadd.s32 %s67, 1
      %p71 = scmp.eq.s32.totalorder %s12, 1
      %p72 = scmp.ne.s32.totalorder %s67, %s69
      %p73 = scmp.eq.s32.totalorder %s12, 0
      %p74 = por %p72, %p73
      %p75 = scmp.ne.s32.totalorder %s67, %s69
      %p76 = scmp.eq.s32.totalorder %s17, 1
      %p77 = por %p75, %p76
      %p78 = scmp.ne.s32.totalorder %s69, %s70
      %p79 = scmp.eq.s32.totalorder %s17, 0
      %p80 = por %p78, %p79
      %p81 = scmp.ne.s32.totalorder %s69, %s70
      %p82 = scmp.eq.s32.totalorder %s18, 1
      %p83 = por %p81, %p82
      %p85 = scmp.ne.s32.totalorder %s70, %s84
      %p86 = scmp.eq.s32.totalorder %s18, 0
      %p87 = por %p85, %p86
      %s88 = ssub.s32 %s12, %s19
      %p89 = scmp.eq.s32.totalorder %s88, 0
      %s91 = sadd.s32 %s90, 1
      %s92 = scalar_select %p89, %s90, %s91
      %p95 = pneg %p89
      %p96 = scmp.eq.s32.totalorder %s12, 1
      %p97 = por %p95, %p96
      %p98 = scmp.ne.s32.totalorder %s90, %s93
      %p99 = scmp.eq.s32.totalorder %s12, 0
      %p100 = por %p98, %p99
      %p101 = scmp.ne.s32.totalorder %s90, %s93
      %p102 = scmp.eq.s32.totalorder %s17, 1
      %p103 = por %p101, %p102
      %p104 = scmp.ne.s32.totalorder %s93, %s94
      %p105 = scmp.eq.s32.totalorder %s17, 0
      %p106 = por %p104, %p105
      %p107 = scmp.ne.s32.totalorder %s93, %s94
      %p108 = scmp.eq.s32.totalorder %s18, 1
      %p109 = por %p107, %p108
      %p111 = scmp.ne.s32.totalorder %s94, %s110
      %p112 = scmp.eq.s32.totalorder %s18, 0
      %p113 = por %p111, %p112
      %p114 = scmp.le.s32.totalorder 1, %s12
      %p115 = scmp.lt.s32.totalorder %s12, 3
      %p116 = pnand %p114, %p115
      %p117 = pneg %p116
      // Predicated region
      $region9: #{seg_merging.1} parent=5 // pred_check
        _
      $region10: #{seg_merging.1} parent=5 // pred_check_branch
        %119 = sbr.rel (%p116) target = $region12
      $region11: #{seg_merging.1} parent=5 // pred_region
        %s120 = ssub.s32 %s12, 1
        // Predicated region
        $region13: #{seg_merging.1} parent=11 // pred_check
          %p121 = pneg %p59
        $region14: #{seg_merging.1} parent=11 // pred_check_branch
          %123 = sbr.rel (%p121) target = $region16
        $region15: #{seg_merging.1} parent=11 // pred_region
          _
        $region16: #{seg_merging.1} parent=11 // pred_fallthru
          _
        // Predicated region
        $region17: #{seg_merging.1} parent=11 // pred_check
          %p124 = pneg %p80
        $region18: #{seg_merging.1} parent=11 // pred_check_branch
          %126 = sbr.rel (%p124) target = $region20
        $region19: #{seg_merging.1} parent=11 // pred_region
          _
        $region20: #{seg_merging.1} parent=11 // pred_fallthru
          _
      $region12: #{seg_merging.1} parent=5 // pred_fallthru
        _
      %p127 = scmp.lt.s32.totalorder %s12, 2
      // Predicated region
      $region21: #{seg_merging.1} parent=5 // pred_check
        %p128 = pneg %p127
      $region22: #{seg_merging.1} parent=5 // pred_check_branch
        %130 = sbr.rel (%p128) target = $region24
      $region23: #{seg_merging.1} parent=5 // pred_region
        // Predicated region
        $region25: #{seg_merging.1} parent=23 // pred_check
          %p131 = pneg %p32
        $region26: #{seg_merging.1} parent=23 // pred_check_branch
          %133 = sbr.rel (%p131) target = $region28
        $region27: #{seg_merging.1} parent=23 // pred_region
          %s134 = smul.u32 2, %s12
          %p135 = scmp.lt.s32.totalorder %s134, 3
          %s136 = scalar_select %p135, %s134, 3
          %s137 = smul.addr %s136, 8
          %s138 = scalar_lea.vmem %s0, %s137
          %s139 = smul.u32 2, %s12
        $region28: #{seg_merging.1} parent=23 // pred_fallthru
          _
      $region24: #{seg_merging.1} parent=5 // pred_fallthru
        _
      %p140 = scmp.le.s32.totalorder 1, %s12
      %p141 = scmp.lt.s32.totalorder %s12, 3
      %p142 = pnand %p140, %p141
      %p143 = pneg %p142
      // Predicated region
      $region29: #{seg_merging.1} parent=5 // pred_check
        _
      $region30: #{seg_merging.1} parent=5 // pred_check_branch
        %145 = sbr.rel (%p142) target = $region32
      $region31: #{seg_merging.1} parent=5 // pred_region
        %s146 = ssub.s32 %s12, 1
        %s147 = smul.u32 2, %s17
        %p148 = scmp.lt.s32.totalorder %s147, 3
        %s149 = scalar_select %p148, %s147, 3
        %s150 = smul.addr %s149, 8
        %s151 = scalar_lea.vmem %s0, %s150
        %p152 = pneg %p38
        %p153 = pneg %p35
        %p154 = pneg %p59
        %p155 = pneg %p56
        %p156 = pneg %p80
        %p157 = pneg %p77
        %p158 = pneg %p106
        %p159 = pneg %p103
        %s160 = sand.u32 %s93, 1
        %s161 = scalar_lea.sflag [#allocation3], %s160
        %s162 = sand.u32 %s93, 1
        %s163 = smul.addr %s162, 16
        %s164 = scalar_lea.vmem [#allocation2], %s163
        %s165 = smul.u32 2, %s17
        %p166 = scmp.lt.s32.totalorder %s165, 3
        %s167 = scalar_select %p166, %s165, 3
        %s168 = smul.addr %s167, 8
        %s169 = scalar_lea.vmem %s0, %s168
        %s170 = smul.u32 2, %s17
        %s171 = smul.u32 2, %s17
        %v172 = vld [vmem:[%s169] sm:$0xff]
        %v173 = vld [vmem:[%s169 + $0x8] sm:$0xff]
        %vm174 = vcmask 523264
        %v175 = vsel %vm174, %v172, 0.0
        %176 = vadd.xlane.f32.xlu0 %v175
        %v177 = vpop.xlane.xlu0 %176
        %v178 = vsel %vm174, %v173, 0.0
        %179 = vadd.xlane.f32.xlu0 %v178
        %v180 = vpop.xlane.xlu0 %179
        %v181 = vrcp.pop 64.0
        %v182 = vmul.f32 64.0, %v181
        %v183 = vsub.f32 1.0, %v182
        %v184 = vmul.f32 %v181, %v183
        %v185 = vadd.f32 %v181, %v184
        %vm186 = vweird.f32 %v181
        %v187 = vsel %vm186, %v181, %v185
        %v188 = vmul.f32 %v177, %v187
        %v189 = vmul.f32 %v180, %v187
        %v190 = vsub.f32 %v172, %v188
        %v191 = vsub.f32 %v173, %v189
        %v192 = vmul.f32 %v190, %v190
        %v193 = vmul.f32 %v191, %v191
        %v194 = vsel %vm174, %v192, 0.0
        %195 = vadd.xlane.f32.xlu0 %v194
        %v196 = vpop.xlane.xlu0 %195
        %v197 = vsel %vm174, %v193, 0.0
        %198 = vadd.xlane.f32.xlu0 %v197
        %v199 = vpop.xlane.xlu0 %198
        %v200 = vmul.f32 %v196, %v187
        %v201 = vmul.f32 %v199, %v187
        %v202 = vadd.f32 %v200, 1e-05
        %v203 = vadd.f32 %v201, 1e-05
        %v204 = vrsqrt.pop %v202
        %v205 = vmul.f32 %v204, %v202
        %v206 = vmul.f32 %v205, %v204
        %v207 = vmul.f32 0.5, %v206
        %v208 = vsub.f32 1.5, %v207
        %v209 = vmul.f32 %v204, %v208
        %vm210 = vweird.f32 %v202
        %vm211 = vweird.f32 %v204
        %vm212 = vmor %vm210, %vm211
        %v213 = vsel %vm212, %v204, %v209
        %v214 = vrsqrt.pop %v203
        %v215 = vmul.f32 %v214, %v203
        %v216 = vmul.f32 %v215, %v214
        %v217 = vmul.f32 0.5, %v216
        %v218 = vsub.f32 1.5, %v217
        %v219 = vmul.f32 %v214, %v218
        %vm220 = vweird.f32 %v203
        %vm221 = vweird.f32 %v214
        %vm222 = vmor %vm220, %vm221
        %v223 = vsel %vm222, %v214, %v219
        %v224 = vmul.f32 %v190, %v213
        %v225 = vmul.f32 %v191, %v223
        %v226 = vld [vmem:[%s1] sm:$0xff]
        %v227 = vld [vmem:[%s1 + $0x8] sm:$0xff]
        %v228 = vld [vmem:[%s1 + $0x10] sm:$0xff]
        %v229 = vld [vmem:[%s1 + $0x18] sm:$0xff]
        %v230 = vld [vmem:[%s1 + $0x20] sm:$0xff]
        %v231 = vld [vmem:[%s1 + $0x28] sm:$0xff]
        %v232 = vld [vmem:[%s1 + $0x30] sm:$0xff]
        %v233 = vld [vmem:[%s1 + $0x38] sm:$0xff]
        %v234 = vld [vmem:[%s2] sm:$0x1]
        %v236 = vperm.slane %v234, 0
        %v239 = vsel %vm174, %v224, 0
        %v242 = vsel %vm174, %v225, 0
        %244 = vmatpush.msra.mxu0 0.0
        %245 = vmatpush.msra.mxu0 0.0
        %246 = vmatpush.msra.mxu0 0.0
        %247 = vmatpush.msra.mxu0 0.0
        %248 = vmatpush.msra.mxu0 0.0
        %249 = vmatpush.msra.mxu0 0.0
        %250 = vmatpush.msra.mxu0 0.0
        %251 = vmatpush.msra.mxu0 0.0
        %252 = vmatpush.msra.mxu0 %v233
        %253 = vmatpush.msra.mxu0 %v232
        %254 = vmatpush.msra.mxu0 %v231
        %255 = vmatpush.msra.mxu0 %v230
        %256 = vmatpush.msra.mxu0 %v229
        %257 = vmatpush.msra.mxu0 %v228
        %258 = vmatpush.msra.mxu0 %v227
        %259 = vmatpush.msra.mxu0 %v226
        %260 = vmatmul.f32.gmra.mxu0 %v239
        %v261 = vpop.f32.mrf.mxu0
        %v262 = vadd.f32 %v236, %v261
        %263 = vmatmul.f32.gmra.mxu0 %v242
        %v264 = vpop.f32.mrf.mxu0
        %v265 = vadd.f32 %v236, %v264
        %266 = vdwg.mxu0
        %267 = vst [vmem:[%s164] sm:$0xff] %v262
        %268 = vst [vmem:[%s164 + $0x8] sm:$0xff] %v265
        %s269 = sand.u32 %s93, 1
        %s270 = scalar_lea.sflag [#allocation3], %s269
        %s271 = sand.u32 %s93, 1
        %s272 = smul.addr %s271, 16
        %s273 = scalar_lea.vmem [#allocation2], %s272
        // Predicated region
        $region33: #{seg_merging.1} parent=31 // pred_check
          %p274 = pneg %p103
        $region34: #{seg_merging.1} parent=31 // pred_check_branch
          %276 = sbr.rel (%p274) target = $region36
        $region35: #{seg_merging.1} parent=31 // pred_region
          %s277 = smul.u32 2, %s17
          %279 = vsyncadd %s270, 0
          %s280 = smul.addr %s277, 8
          %s281 = scalar_lea.hbm %s3, %s280
          %s282 = sshll.u32 %s273, 4
          %s283 = int_to_ptr.vmem [resolvable:$true] %s282
          %s284 = sshll.u32 %s281, 4
          %s285 = int_to_ptr.hbm [resolvable:$true] %s284
          %290 = dma.vmem_to_hbm [thread:$0]  %s283, 256, %s285, %s270, 128, 128, 8
        $region36: #{seg_merging.1} parent=31 // pred_fallthru
          _
      $region32: #{seg_merging.1} parent=5 // pred_fallthru
        _
      %p291 = scmp.le.s32.totalorder 2, %s12
      // Predicated region
      $region37: #{seg_merging.1} parent=5 // pred_check
        %p292 = pneg %p291
      $region38: #{seg_merging.1} parent=5 // pred_check_branch
        %294 = sbr.rel (%p292) target = $region40
      $region39: #{seg_merging.1} parent=5 // pred_region
        %s295 = ssub.s32 %s12, 2
        // Predicated region
        $region41: #{seg_merging.1} parent=39 // pred_check
          %p296 = pneg %p109
        $region42: #{seg_merging.1} parent=39 // pred_check_branch
          %298 = sbr.rel (%p296) target = $region44
        $region43: #{seg_merging.1} parent=39 // pred_region
          %s299 = sand.u32 %s94, 1
          %s300 = scalar_lea.sflag [#allocation3], %s299
          %s301 = sand.u32 %s94, 1
          %s302 = smul.addr %s301, 16
          %s303 = scalar_lea.vmem [#allocation2], %s302
          %305 = dma.done %s300, 256
        $region44: #{seg_merging.1} parent=39 // pred_fallthru
          _
      $region40: #{seg_merging.1} parent=5 // pred_fallthru
        _
    $region6: #{seg_merging.1} parent=1 // loop_footer
      %s16 = sadd.s32 1, %s12
    $region7: #{seg_merging.1} parent=1 // loop_footer_branch
      %11 = sbr.rel target = $region3
    $region8: #{seg_merging.1} parent=1 // loop_exit
      _
    %306 = vsyncpa [#allocation3], 1
    %s307 = scalar_lea.sflag [#allocation3], 1
    %308 = vsyncpa %s307, 1

</llo_original>
